<compile_context>
chip_gen: v5e
topology: v5e:2x2
jax: 0.10.0
libtpu: 0.0.40
codegen_flags: <defaults>
</compile_context>

<pallas_src>
import functools

import jax
import jax.numpy as jnp
from jax.experimental import pallas as pl
from jax.experimental.pallas import tpu as pltpu


def attflat_kernel(x_ref, mask_ref, w1_ref, b1_ref, w2_ref, b2_ref,
                   wm_ref, bm_ref, out_ref, *, mxu_dtype):
    TB, S = mask_ref.shape
    H = x_ref.shape[-1]
    G = w2_ref.shape[-1]

    x2d = x_ref[...]                                    # (TB*S, H), input dtype
    xb = x2d.astype(mxu_dtype)                          # in-kernel cast for MXU

    # MLP: Linear -> ReLU -> (dropout == identity in eval) -> Linear
    h = jnp.dot(xb, w1_ref[...],
                preferred_element_type=jnp.float32) + b1_ref[...]      # (TB*S, M) f32
    h = jnp.maximum(h, 0.0)
    # NOTE: (TB*S, M) @ (M, G=2) uses only 2 MXU output columns; if bundle
    # dumps at very large TB show vmatmul pushes binding, compute these G
    # logit columns on the VPU instead (broadcast-mul + lane reduce over M).
    att = jnp.dot(h.astype(mxu_dtype), w2_ref[...],
                  preferred_element_type=jnp.float32) + b2_ref[...]    # (TB*S, G) f32

    # masked_fill(mask == 1, -1e9) as an additive bias computed in-kernel (VPU).
    mask_bias = mask_ref[...].astype(jnp.float32) * jnp.float32(-1.0e9)  # (TB, S)
    att = att.reshape(TB, S, G) + mask_bias[:, :, None]

    # softmax over the sequence axis (torch dim=1)
    att = att - jnp.max(att, axis=1, keepdims=True)
    e = jnp.exp(att)
    denom = jnp.sum(e, axis=1, keepdims=True)
    att = e * pl.reciprocal(denom, approx=(mxu_dtype != jnp.float32))   # (TB, S, G)

    # glimpse-weighted sums over the sequence, fused with the merge matmul:
    #   out = sum_g (sum_s att[:, s, g] * x[:, s, :]) @ wm[g]  + bm
    x3d = x2d.reshape(TB, S, H).astype(jnp.float32)
    acc = jnp.zeros(out_ref.shape, jnp.float32)                         # (TB, O_pad)
    for gi in range(G):                                                 # G small & static
        g_vec = jnp.sum(att[:, :, gi:gi + 1] * x3d, axis=1)             # (TB, H) f32
        acc = acc + jnp.dot(g_vec.astype(mxu_dtype), wm_ref[gi],
                            preferred_element_type=jnp.float32)
    out_ref[...] = (acc + bm_ref[...]).astype(out_ref.dtype)


def _pick_block_b(B, S):
    # Target >= ~1024 rows (TB*S) of MXU work / >= ~0.5-1 MB of HBM traffic per
    # grid step, keep the "parallel" grid >= 2 where possible (v7x: 2 TCs),
    # and keep TB sublane-friendly (multiple of 16/8, or the whole batch) so
    # every block satisfies the (8,128) rule.
    cap = min(max(1, 1024 // max(S, 1)), max(1, B // 2))
    for step in (16, 8):
        best = 0
        for d in range(step, cap + 1, step):
            if B % d == 0:
                best = d
        if best:
            return best
    return B


def att_flat(x, x_mask, params, *, block_b=None, mxu_dtype=jnp.bfloat16,
             out_dtype=jnp.bfloat16, vmem_limit_bytes=None):
    """x: [B, S, H]; x_mask: torch-style [B, 1, 1, S] with 1 = masked position."""
    B, S, H = x.shape
    M = params["w1"].shape[1]
    G = params["w2"].shape[1]
    O = params["wm"].shape[1]
    O_pad = ((O + 127) // 128) * 128            # lane-dense output slab

    TB = _pick_block_b(B, S) if block_b is None else block_b
    assert B % TB == 0 and (TB == B or TB % 8 == 0), \
        "block_b must divide B and be a multiple of 8 (or the whole batch)"

    # x keeps its input dtype (no wrapper cast, no extra HBM pass); flatten is
    # a free metadata reshape.  Raw {0,1} mask travels as a small bf16 array.
    x2d = x.reshape(B * S, H)
    mask2d = x_mask.reshape(B, S).astype(jnp.bfloat16)

    # Host-side weight prep (small, grid-invariant): cast MXU operands and
    # pre-shape/pad the merge weight so no [G,H]->[1,G*H] reshape is needed.
    w1 = params["w1"].astype(mxu_dtype)                      # (H, M)
    w2 = params["w2"].astype(mxu_dtype)                      # (M, G)
    wm = params["wm"].reshape(G, H, O).astype(mxu_dtype)     # (G, H, O)
    wm = jnp.pad(wm, ((0, 0), (0, 0), (0, O_pad - O)))
    b1 = params["b1"].astype(jnp.float32).reshape(1, M)
    b2 = params["b2"].astype(jnp.float32).reshape(1, G)
    bm = jnp.pad(params["bm"].astype(jnp.float32).reshape(1, O),
                 ((0, 0), (0, O_pad - O)))                   # (1, O_pad)

    def invariant_spec(a):
        # Whole array every step; single-buffered (the block never changes).
        return pl.BlockSpec(a.shape, lambda b, _nd=a.ndim: (0,) * _nd,
                            pipeline_mode=pl.Buffered(1))

    w_itemsize = jnp.dtype(mxu_dtype).itemsize
    cost = pl.CostEstimate(
        flops=2 * B * S * (H * M + M * G + H * G) + 2 * B * G * H * O_pad,
        transcendentals=B * S * G,
        bytes_accessed=(x2d.size * x2d.dtype.itemsize
                        + mask2d.size * 2
                        + (w1.size + w2.size + wm.size) * w_itemsize
                        + (b1.size + b2.size + bm.size) * 4
                        + B * O_pad * jnp.dtype(out_dtype).itemsize))

    out = pl.pallas_call(
        functools.partial(attflat_kernel, mxu_dtype=mxu_dtype),
        out_shape=jax.ShapeDtypeStruct((B, O_pad), out_dtype),
        grid=(B // TB,),
        in_specs=[
            pl.BlockSpec((TB * S, H), lambda b: (b, 0)),     # x slab (2-D)
            pl.BlockSpec((TB, S), lambda b: (b, 0)),         # raw {0,1} mask
            invariant_spec(w1), invariant_spec(b1),
            invariant_spec(w2), invariant_spec(b2),
            invariant_spec(wm), invariant_spec(bm),
        ],
        out_specs=pl.BlockSpec((TB, O_pad), lambda b: (b, 0)),
        compiler_params=pltpu.CompilerParams(
            dimension_semantics=("parallel",),
            vmem_limit_bytes=vmem_limit_bytes),
        cost_estimate=cost,
    )(x2d, mask2d, w1, b1, w2, b2, wm, bm)

    return out[:, :O]


if __name__ == "__main__":
    # config: hidden_size=32, flat_mlp_size=64, flat_glimpses=2, flat_out_size=64
    B, S, H, M, G, O = 2, 8, 32, 64, 2, 64

    key = jax.random.PRNGKey(0)
    ks = jax.random.split(key, 8)
    x = jax.random.normal(ks[0], (B, S, H), jnp.float32)
    # torch-style mask: [B, 1, 1, S], 1 = masked (padding) position
    x_mask = (jax.random.uniform(ks[1], (B, 1, 1, S)) < 0.25).astype(jnp.int32)

    params = dict(
        w1=0.1 * jax.random.normal(ks[2], (H, M), jnp.float32),
        b1=0.1 * jax.random.normal(ks[3], (1, M), jnp.float32),
        w2=0.1 * jax.random.normal(ks[4], (M, G), jnp.float32),
        b2=0.1 * jax.random.normal(ks[5], (1, G), jnp.float32),
        wm=0.1 * jax.random.normal(ks[6], (G * H, O), jnp.float32),
        bm=0.1 * jax.random.normal(ks[7], (1, O), jnp.float32),
    )

    # pure-JAX reference (mirrors the PyTorch forward, eval mode)
    def ref(x, x_mask, p):
        h = jax.nn.relu(x @ p["w1"] + p["b1"])
        att = h @ p["w2"] + p["b2"]
        m = x_mask.reshape(B, S, 1)
        att = jnp.where(m == 1, -1000000000.0, att)
        att = jax.nn.softmax(att, axis=1)
        g = jnp.einsum("bsg,bsh->bgh", att, x).reshape(B, G * H)
        return g @ p["wm"] + p["bm"]

    r = ref(x, x_mask, params)

    # default path: bf16 MXU inputs (f32 accumulation), lane-dense bf16 output
    out_bf16 = att_flat(x, x_mask, params)
    jax.block_until_ready(out_bf16)
    assert out_bf16.shape == (B, O)
    assert jnp.allclose(out_bf16.astype(jnp.float32), r, atol=5e-2, rtol=5e-2), \
        (out_bf16, r)

    # full-f32 matmuls + f32 output (exact softmax reciprocal) — tighter tol
    out_f32 = att_flat(x, x_mask, params, mxu_dtype=jnp.float32,
                       out_dtype=jnp.float32)
    jax.block_until_ready(out_f32)
    assert jnp.allclose(out_f32, r, atol=1e-2, rtol=1e-2), (out_f32, r)

    print("KERNEL_OK")
</pallas_src>

<mosaic_0001>
module attributes {stable_mosaic.version = 11 : i64} {
  func.func @attflat_kernel(%arg0: i32, %arg1: memref<16x32xf32, #tpu.memory_space<vmem>>, %arg2: memref<2x8xbf16, #tpu.memory_space<vmem>>, %arg3: memref<32x64xbf16, #tpu.memory_space<vmem>>, %arg4: memref<1x64xf32, #tpu.memory_space<vmem>>, %arg5: memref<64x2xbf16, #tpu.memory_space<vmem>>, %arg6: memref<1x2xf32, #tpu.memory_space<vmem>>, %arg7: memref<2x32x128xbf16, #tpu.memory_space<vmem>>, %arg8: memref<1x128xf32, #tpu.memory_space<vmem>>, %arg9: memref<2x128xbf16, #tpu.memory_space<vmem>>) attributes {dimension_semantics = [#tpu.dimension_semantics<parallel>], iteration_bounds = array<i64: 1>, scalar_prefetch = 0 : i64, scratch_operands = 0 : i64, tpu.core_type = #tpu.core_type<tc>, window_params = [{transform_indices = @transform_0, window_bounds = array<i64: 16, 32>}, {transform_indices = @transform_1, window_bounds = array<i64: 2, 8>}, {pipeline_mode = #tpu.pipeline_mode<synchronous>, transform_indices = @transform_2, window_bounds = array<i64: 32, 64>}, {pipeline_mode = #tpu.pipeline_mode<synchronous>, transform_indices = @transform_3, window_bounds = array<i64: 1, 64>}, {pipeline_mode = #tpu.pipeline_mode<synchronous>, transform_indices = @transform_4, window_bounds = array<i64: 64, 2>}, {pipeline_mode = #tpu.pipeline_mode<synchronous>, transform_indices = @transform_5, window_bounds = array<i64: 1, 2>}, {pipeline_mode = #tpu.pipeline_mode<synchronous>, transform_indices = @transform_6, window_bounds = array<i64: 2, 32, 128>}, {pipeline_mode = #tpu.pipeline_mode<synchronous>, transform_indices = @transform_7, window_bounds = array<i64: 1, 128>}, {transform_indices = @transform_8, window_bounds = array<i64: 2, 128>}]} {
    %c0 = arith.constant 0 : index
    %c0_0 = arith.constant 0 : index
    %0 = vector.load %arg1[%c0, %c0_0] : memref<16x32xf32, #tpu.memory_space<vmem>>, vector<16x32xf32>
    %1 = arith.truncf %0 : vector<16x32xf32> to vector<16x32xbf16>
    %c0_1 = arith.constant 0 : index
    %c0_2 = arith.constant 0 : index
    %2 = vector.load %arg3[%c0_1, %c0_2] : memref<32x64xbf16, #tpu.memory_space<vmem>>, vector<32x64xbf16>
    %cst = arith.constant dense<0.000000e+00> : vector<16x64xf32>
    %3 = tpu.matmul %1, %2, %cst {dimension_numbers = #tpu.dot_dimension_numbers<[1], [0], [0], [1], [0, 0, 1, 1], [], []>} : vector<16x32xbf16>, vector<32x64xbf16>, vector<16x64xf32> -> vector<16x64xf32>
    %c0_3 = arith.constant 0 : index
    %c0_4 = arith.constant 0 : index
    %4 = vector.load %arg4[%c0_3, %c0_4] : memref<1x64xf32, #tpu.memory_space<vmem>>, vector<1x64xf32>
    %5 = vector.broadcast %4 : vector<1x64xf32> to vector<16x64xf32>
    %6 = arith.addf %3, %5 : vector<16x64xf32>
    %cst_5 = arith.constant 0.000000e+00 : f32
    %7 = vector.broadcast %cst_5 : f32 to vector<16x64xf32>
    %8 = arith.maximumf %6, %7 : vector<16x64xf32>
    %9 = arith.truncf %8 : vector<16x64xf32> to vector<16x64xbf16>
    %c0_6 = arith.constant 0 : index
    %c0_7 = arith.constant 0 : index
    %10 = vector.load %arg5[%c0_6, %c0_7] : memref<64x2xbf16, #tpu.memory_space<vmem>>, vector<64x2xbf16>
    %cst_8 = arith.constant dense<0.000000e+00> : vector<16x2xf32>
    %11 = tpu.matmul %9, %10, %cst_8 {dimension_numbers = #tpu.dot_dimension_numbers<[1], [0], [0], [1], [0, 0, 1, 1], [], []>} : vector<16x64xbf16>, vector<64x2xbf16>, vector<16x2xf32> -> vector<16x2xf32>
    %c0_9 = arith.constant 0 : index
    %c0_10 = arith.constant 0 : index
    %12 = vector.load %arg6[%c0_9, %c0_10] : memref<1x2xf32, #tpu.memory_space<vmem>>, vector<1x2xf32>
    %13 = vector.broadcast %12 : vector<1x2xf32> to vector<16x2xf32>
    %14 = arith.addf %11, %13 : vector<16x2xf32>
    %c0_11 = arith.constant 0 : index
    %c0_12 = arith.constant 0 : index
    %15 = vector.load %arg2[%c0_11, %c0_12] : memref<2x8xbf16, #tpu.memory_space<vmem>>, vector<2x8xbf16>
    %16 = arith.extf %15 : vector<2x8xbf16> to vector<2x8xf32>
    %cst_13 = arith.constant -1.000000e+09 : f32
    %17 = vector.broadcast %cst_13 : f32 to vector<2x8xf32>
    %18 = arith.mulf %16, %17 : vector<2x8xf32>
    %19 = vector.shape_cast %14 : vector<16x2xf32> to vector<2x8x2xf32>
    %20 = vector.shape_cast %18 : vector<2x8xf32> to vector<2x8x1xf32>
    %21 = vector.broadcast %20 : vector<2x8x1xf32> to vector<2x8x2xf32>
    %22 = arith.addf %19, %21 : vector<2x8x2xf32>
    %cst_14 = arith.constant dense<0xFF800000> : vector<2x2xf32>
    %23 = vector.multi_reduction <maximumf>, %22, %cst_14 [1] : vector<2x8x2xf32> to vector<2x2xf32>
    %24 = vector.shape_cast %23 : vector<2x2xf32> to vector<2x1x2xf32>
    %25 = vector.broadcast %24 : vector<2x1x2xf32> to vector<2x8x2xf32>
    %26 = arith.subf %22, %25 : vector<2x8x2xf32>
    %27 = math.exp %26 : vector<2x8x2xf32>
    %cst_15 = arith.constant dense<0.000000e+00> : vector<2x2xf32>
    %28 = vector.multi_reduction <add>, %27, %cst_15 [1] : vector<2x8x2xf32> to vector<2x2xf32>
    %29 = vector.shape_cast %28 : vector<2x2xf32> to vector<2x1x2xf32>
    %30 = tpu.reciprocal %29 {approx = true} : vector<2x1x2xf32> -> vector<2x1x2xf32>
    %31 = vector.broadcast %30 : vector<2x1x2xf32> to vector<2x8x2xf32>
    %32 = arith.mulf %27, %31 : vector<2x8x2xf32>
    %33 = vector.shape_cast %0 : vector<16x32xf32> to vector<2x8x32xf32>
    %cst_16 = arith.constant 0.000000e+00 : f32
    %34 = vector.broadcast %cst_16 : f32 to vector<2x128xf32>
    %35 = vector.extract_strided_slice %32 {offsets = [0, 0, 0], sizes = [2, 8, 1], strides = [1, 1, 1]} : vector<2x8x2xf32> to vector<2x8x1xf32>
    %36 = vector.broadcast %35 : vector<2x8x1xf32> to vector<2x8x32xf32>
    %37 = arith.mulf %36, %33 : vector<2x8x32xf32>
    %cst_17 = arith.constant dense<0.000000e+00> : vector<2x32xf32>
    %38 = vector.multi_reduction <add>, %37, %cst_17 [1] : vector<2x8x32xf32> to vector<2x32xf32>
    %39 = arith.truncf %38 : vector<2x32xf32> to vector<2x32xbf16>
    %c0_18 = arith.constant 0 : index
    %c0_19 = arith.constant 0 : index
    %c0_20 = arith.constant 0 : index
    %40 = vector.load %arg7[%c0_18, %c0_19, %c0_20] : memref<2x32x128xbf16, #tpu.memory_space<vmem>>, vector<1x32x128xbf16>
    %41 = vector.shape_cast %40 : vector<1x32x128xbf16> to vector<32x128xbf16>
    %cst_21 = arith.constant dense<0.000000e+00> : vector<2x128xf32>
    %42 = tpu.matmul %39, %41, %cst_21 {dimension_numbers = #tpu.dot_dimension_numbers<[1], [0], [0], [1], [0, 0, 1, 1], [], []>} : vector<2x32xbf16>, vector<32x128xbf16>, vector<2x128xf32> -> vector<2x128xf32>
    %43 = arith.addf %34, %42 : vector<2x128xf32>
    %44 = vector.extract_strided_slice %32 {offsets = [0, 0, 1], sizes = [2, 8, 1], strides = [1, 1, 1]} : vector<2x8x2xf32> to vector<2x8x1xf32>
    %45 = vector.broadcast %44 : vector<2x8x1xf32> to vector<2x8x32xf32>
    %46 = arith.mulf %45, %33 : vector<2x8x32xf32>
    %cst_22 = arith.constant dense<0.000000e+00> : vector<2x32xf32>
    %47 = vector.multi_reduction <add>, %46, %cst_22 [1] : vector<2x8x32xf32> to vector<2x32xf32>
    %48 = arith.truncf %47 : vector<2x32xf32> to vector<2x32xbf16>
    %c1 = arith.constant 1 : index
    %c0_23 = arith.constant 0 : index
    %c0_24 = arith.constant 0 : index
    %49 = vector.load %arg7[%c1, %c0_23, %c0_24] : memref<2x32x128xbf16, #tpu.memory_space<vmem>>, vector<1x32x128xbf16>
    %50 = vector.shape_cast %49 : vector<1x32x128xbf16> to vector<32x128xbf16>
    %cst_25 = arith.constant dense<0.000000e+00> : vector<2x128xf32>
    %51 = tpu.matmul %48, %50, %cst_25 {dimension_numbers = #tpu.dot_dimension_numbers<[1], [0], [0], [1], [0, 0, 1, 1], [], []>} : vector<2x32xbf16>, vector<32x128xbf16>, vector<2x128xf32> -> vector<2x128xf32>
    %52 = arith.addf %43, %51 : vector<2x128xf32>
    %c0_26 = arith.constant 0 : index
    %c0_27 = arith.constant 0 : index
    %53 = vector.load %arg8[%c0_26, %c0_27] : memref<1x128xf32, #tpu.memory_space<vmem>>, vector<1x128xf32>
    %54 = vector.broadcast %53 : vector<1x128xf32> to vector<2x128xf32>
    %55 = arith.addf %52, %54 : vector<2x128xf32>
    %56 = arith.truncf %55 : vector<2x128xf32> to vector<2x128xbf16>
    %c0_28 = arith.constant 0 : index
    %c0_29 = arith.constant 0 : index
    %57 = vector.load %arg9[%c0_28, %c0_29] : memref<2x128xbf16, #tpu.memory_space<vmem>>, vector<2x128xbf16>
    tpu.vector_store %arg9[%c0_28, %c0_29], %56 {strides = array<i32>} : memref<2x128xbf16, #tpu.memory_space<vmem>>, vector<2x128xbf16>,
    return
  }
  func.func @transform_0(%arg0: i32) -> (i32, i32) {
    %c0_i32 = arith.constant 0 : i32
    %c0_i32_0 = arith.constant 0 : i32
    return %arg0, %c0_i32 : i32, i32
  }
  func.func @transform_1(%arg0: i32) -> (i32, i32) {
    %c0_i32 = arith.constant 0 : i32
    %c0_i32_0 = arith.constant 0 : i32
    return %arg0, %c0_i32 : i32, i32
  }
  func.func @transform_2(%arg0: i32) -> (i32, i32) {
    %c0_i32 = arith.constant 0 : i32
    %c0_i32_0 = arith.constant 0 : i32
    %c0_i32_1 = arith.constant 0 : i32
    return %c0_i32, %c0_i32_0 : i32, i32
  }
  func.func @transform_3(%arg0: i32) -> (i32, i32) {
    %c0_i32 = arith.constant 0 : i32
    %c0_i32_0 = arith.constant 0 : i32
    %c0_i32_1 = arith.constant 0 : i32
    return %c0_i32, %c0_i32_0 : i32, i32
  }
  func.func @transform_4(%arg0: i32) -> (i32, i32) {
    %c0_i32 = arith.constant 0 : i32
    %c0_i32_0 = arith.constant 0 : i32
    %c0_i32_1 = arith.constant 0 : i32
    return %c0_i32, %c0_i32_0 : i32, i32
  }
  func.func @transform_5(%arg0: i32) -> (i32, i32) {
    %c0_i32 = arith.constant 0 : i32
    %c0_i32_0 = arith.constant 0 : i32
    %c0_i32_1 = arith.constant 0 : i32
    return %c0_i32, %c0_i32_0 : i32, i32
  }
  func.func @transform_6(%arg0: i32) -> (i32, i32, i32) {
    %c0_i32 = arith.constant 0 : i32
    %c0_i32_0 = arith.constant 0 : i32
    %c0_i32_1 = arith.constant 0 : i32
    %c0_i32_2 = arith.constant 0 : i32
    return %c0_i32, %c0_i32_0, %c0_i32_1 : i32, i32, i32
  }
  func.func @transform_7(%arg0: i32) -> (i32, i32) {
    %c0_i32 = arith.constant 0 : i32
    %c0_i32_0 = arith.constant 0 : i32
    %c0_i32_1 = arith.constant 0 : i32
    return %c0_i32, %c0_i32_0 : i32, i32
  }
  func.func @transform_8(%arg0: i32) -> (i32, i32) {
    %c0_i32 = arith.constant 0 : i32
    %c0_i32_0 = arith.constant 0 : i32
    return %arg0, %c0_i32 : i32, i32
  }
}

</mosaic_0001>

<llo_original>
// kernel: tpu_custom_call.1
$region0: #{tpu_custom_call.1}
  #allocation0 [shape = 'u32[]', space=smem, size = 0x4, offset = 0x4, fixed_abs, tag = 'smem constant byte address 0x4 - core index']
  #allocation1 [shape = 'u32[72,128]{1,0:T(1,128)}', space=vmem, size = 0x9000, scoped, tag = 'internal scratch']
  %s0 = inlined_call_operand.hbm [shape: f32[16,32], index: 0, kind: input, shape index: {}]
  %s1 = inlined_call_operand.vmem [shape: bf16[2,8], index: 1, kind: input, shape index: {}]
  %s2 = inlined_call_operand.hbm [shape: bf16[32,64], index: 2, kind: input, shape index: {}]
  %s3 = inlined_call_operand.vmem [shape: f32[1,64], index: 3, kind: input, shape index: {}]
  %s4 = inlined_call_operand.vmem [shape: bf16[64,2], index: 4, kind: input, shape index: {}]
  %s5 = inlined_call_operand.vmem [shape: f32[1,2], index: 5, kind: input, shape index: {}]
  %s6 = inlined_call_operand.vmem [shape: bf16[2,32,128], index: 6, kind: input, shape index: {}]
  %s7 = inlined_call_operand.vmem [shape: f32[1,128], index: 7, kind: input, shape index: {}]
  %s8 = inlined_call_operand.hbm [shape: bf16[2,128], index: 8, kind: output, shape index: {}]
  %s9 = sld [smem:[#allocation0]]
  $region50: #{tpu_custom_call.1} parent=0
    _
  %s11 = ssub.s32 1, %s9
  %s12 = scalar_select 0, %s11, %s9
  $region1: #{tpu_custom_call.1} parent=0
    #allocation2 [shape = 'u8[8192]{0}', space=vmem, size = 0x2000, scoped, tag = 'input window, operand 0, single buffered']
    #allocation3 [shape = 's32[1]{0}', space=sflag, size = 0x4, scoped, tag = 'scoped memory for tpu_custom_call.1']
    #allocation4 [shape = 's32[1]{0}', space=sflag, size = 0x4, scoped, tag = 'scoped memory for tpu_custom_call.1']
    #allocation5 [shape = 'u8[8192]{0}', space=vmem, size = 0x2000, scoped, tag = 'input window, operand 2, single buffered']
    #allocation6 [shape = 's32[1]{0}', space=sflag, size = 0x4, scoped, tag = 'scoped memory for tpu_custom_call.1']
    #allocation7 [shape = 'u8[512]{0}', space=vmem, size = 0x400, scoped, tag = 'output window, operand 0, single buffered']
    %13 = vsyncpa [#allocation3], 0
    %14 = vsyncpa [#allocation6], 0
    %15 = vsyncpa [#allocation4], 0
    // Predicated region
    $region2: #{tpu_custom_call.1} parent=1 // pred_check
      _
    $region3: #{tpu_custom_call.1} parent=1 // pred_check_branch
      %17 = sbr.rel (0) target = $region5
    $region4: #{tpu_custom_call.1} parent=1 // pred_region
      %19 = vsyncadd [#allocation3], 0
      %s20 = sshll.u32 %s0, 4
      %s21 = int_to_ptr.hbm [resolvable:$true] %s20
      %s22 = sshll.u32 [#allocation2], 4
      %s23 = int_to_ptr.vmem [resolvable:$true] %s22
      %28 = dma.hbm_to_vmem [thread:$0]  %s21, 256, %s23, [#allocation3], 128, 128, 8
    $region5: #{tpu_custom_call.1} parent=1 // pred_fallthru
      _
    // Predicated region
    $region6: #{tpu_custom_call.1} parent=1 // pred_check
      _
    $region7: #{tpu_custom_call.1} parent=1 // pred_check_branch
      %30 = sbr.rel (0) target = $region9
    $region8: #{tpu_custom_call.1} parent=1 // pred_region
      _
    $region9: #{tpu_custom_call.1} parent=1 // pred_fallthru
      _
    // Predicated region
    $region10: #{tpu_custom_call.1} parent=1 // pred_check
      _
    $region11: #{tpu_custom_call.1} parent=1 // pred_check_branch
      %32 = sbr.rel (0) target = $region13
    $region12: #{tpu_custom_call.1} parent=1 // pred_region
      %34 = vsyncadd [#allocation6], 0
      %s35 = sshll.u32 %s2, 4
      %s36 = int_to_ptr.hbm [resolvable:$true] %s35
      %s37 = sshll.u32 [#allocation5], 4
      %s38 = int_to_ptr.vmem [resolvable:$true] %s37
      %43 = dma.hbm_to_vmem [thread:$0]  %s36, 256, %s38, [#allocation6], 64, 64, 4
    $region13: #{tpu_custom_call.1} parent=1 // pred_fallthru
      _
    // Predicated region
    $region14: #{tpu_custom_call.1} parent=1 // pred_check
      _
    $region15: #{tpu_custom_call.1} parent=1 // pred_check_branch
      %45 = sbr.rel (0) target = $region17
    $region16: #{tpu_custom_call.1} parent=1 // pred_region
      _
    $region17: #{tpu_custom_call.1} parent=1 // pred_fallthru
      _
    // Predicated region
    $region18: #{tpu_custom_call.1} parent=1 // pred_check
      _
    $region19: #{tpu_custom_call.1} parent=1 // pred_check_branch
      %47 = sbr.rel (0) target = $region21
    $region20: #{tpu_custom_call.1} parent=1 // pred_region
      _
    $region21: #{tpu_custom_call.1} parent=1 // pred_fallthru
      _
    // Predicated region
    $region22: #{tpu_custom_call.1} parent=1 // pred_check
      _
    $region23: #{tpu_custom_call.1} parent=1 // pred_check_branch
      %49 = sbr.rel (0) target = $region25
    $region24: #{tpu_custom_call.1} parent=1 // pred_region
      _
    $region25: #{tpu_custom_call.1} parent=1 // pred_fallthru
      _
    // Predicated region
    $region26: #{tpu_custom_call.1} parent=1 // pred_check
      _
    $region27: #{tpu_custom_call.1} parent=1 // pred_check_branch
      %51 = sbr.rel (0) target = $region29
    $region28: #{tpu_custom_call.1} parent=1 // pred_region
      _
    $region29: #{tpu_custom_call.1} parent=1 // pred_fallthru
      _
    // Predicated region
    $region30: #{tpu_custom_call.1} parent=1 // pred_check
      _
    $region31: #{tpu_custom_call.1} parent=1 // pred_check_branch
      %53 = sbr.rel (0) target = $region33
    $region32: #{tpu_custom_call.1} parent=1 // pred_region
      _
    $region33: #{tpu_custom_call.1} parent=1 // pred_fallthru
      _
    // Predicated region
    $region34: #{tpu_custom_call.1} parent=1 // pred_check
      _
    $region35: #{tpu_custom_call.1} parent=1 // pred_check_branch
      %55 = sbr.rel (0) target = $region37
    $region36: #{tpu_custom_call.1} parent=1 // pred_region
      %57 = dma.done [#allocation3], 256
    $region37: #{tpu_custom_call.1} parent=1 // pred_fallthru
      _
    // Predicated region
    $region38: #{tpu_custom_call.1} parent=1 // pred_check
      _
    $region39: #{tpu_custom_call.1} parent=1 // pred_check_branch
      %59 = sbr.rel (0) target = $region41
    $region40: #{tpu_custom_call.1} parent=1 // pred_region
      %61 = dma.done [#allocation6], 256
    $region41: #{tpu_custom_call.1} parent=1 // pred_fallthru
      _
    %v63 = vld [vmem:[#allocation2] sm:$0xff]
    %v64 = vld [vmem:[#allocation2 + $0x8] sm:$0xff]
    %v65 = vpack.c.bf16 %v64, %v63
    %v66 = vld [vmem:[#allocation5] sm:$0xf]
    %v67 = vld [vmem:[#allocation5 + $0x4] sm:$0xf]
    %v68 = vld [vmem:[#allocation5 + $0x8] sm:$0xf]
    %v69 = vld [vmem:[#allocation5 + $0xc] sm:$0xf]
    %v70 = vld [vmem:[%s3] sm:$0x1]
    %v72 = vperm.slane %v70, 0
    %v78 = vunpack.c.l.b16 %v66
    %v79 = vunpack.c.l.b16 %v67
    %v80 = vunpack.c.l.b16 %v68
    %v81 = vunpack.c.l.b16 %v69
    %v82 = vpack.c.b16 %v79, %v78
    %v83 = vpack.c.b16 %v81, %v80
    %vm86 = vcmask 261120
    %v88 = vsel %vm86, %v65, 0
    %90 = vmatpush.bf16.msra.mxu0 0
    %91 = vmatpush.bf16.msra.mxu0 0
    %92 = vmatpush.bf16.msra.mxu0 0
    %93 = vmatpush.bf16.msra.mxu0 0
    %94 = vmatpush.bf16.msra.mxu0 0
    %95 = vmatpush.bf16.msra.mxu0 0
    %96 = vmatpush.bf16.msra.mxu0 %v83
    %97 = vmatpush.bf16.msra.mxu0 %v82
    %98 = vmatmul.bf16.gmra.mxu0 %v88
    %v99 = vpop.f32.mrf.mxu0
    %v100 = vadd.f32 %v72, %v99
    %v101 = vpop.f32.mrf.mxu0
    %v102 = vadd.f32 %v72, %v101
    %103 = vdwg.mxu0
    %v104 = vmax.f32 %v100, 0.0
    %v105 = vmax.f32 %v102, 0.0
    %v106 = vpack.c.bf16 %v105, %v104
    %v107 = vld [vmem:[%s4] sm:$0xf]
    %v108 = vld [vmem:[%s4 + $0x4] sm:$0xf]
    %v109 = vld [vmem:[%s4 + $0x8] sm:$0xf]
    %v110 = vld [vmem:[%s4 + $0xc] sm:$0xf]
    %v111 = vld [vmem:[%s4 + $0x10] sm:$0xf]
    %v112 = vld [vmem:[%s4 + $0x14] sm:$0xf]
    %v113 = vld [vmem:[%s4 + $0x18] sm:$0xf]
    %v114 = vld [vmem:[%s4 + $0x1c] sm:$0xf]
    %v115 = vld [vmem:[%s5] sm:$0x1]
    %v117 = vperm.slane %v115, 0
    %v127 = vunpack.c.l.b16 %v107
    %v128 = vunpack.c.l.b16 %v108
    %v129 = vunpack.c.l.b16 %v109
    %v130 = vunpack.c.l.b16 %v110
    %v131 = vunpack.c.l.b16 %v111
    %v132 = vunpack.c.l.b16 %v112
    %v133 = vunpack.c.l.b16 %v113
    %v134 = vunpack.c.l.b16 %v114
    %v135 = vpack.c.b16 %v128, %v127
    %v136 = vpack.c.b16 %v130, %v129
    %v137 = vpack.c.b16 %v132, %v131
    %v138 = vpack.c.b16 %v134, %v133
    %vm143 = vcmask 523264
    %v145 = vsel %vm143, %v106, 0
    %147 = vmatpush.bf16.msra.mxu0 0
    %148 = vmatpush.bf16.msra.mxu0 0
    %149 = vmatpush.bf16.msra.mxu0 0
    %150 = vmatpush.bf16.msra.mxu0 0
    %151 = vmatpush.bf16.msra.mxu0 %v138
    %152 = vmatpush.bf16.msra.mxu0 %v137
    %153 = vmatpush.bf16.msra.mxu0 %v136
    %154 = vmatpush.bf16.msra.mxu0 %v135
    %155 = vmatmul.bf16.gmra.mxu0 %v145
    %v156 = vpop.f32.mrf.mxu0
    %v157 = vadd.f32 %v117, %v156
    %v158 = vpop.f32.mrf.mxu0
    %v159 = vadd.f32 %v117, %v158
    %160 = vdwg.mxu0
    %v161 = vld [vmem:[%s1] sm:$0x1]
    %v162 = vunpack.c.l.bf16 %v161
    %v163 = vmul.f32 %v162, -1e+09
    %v164 = vperm.slane %v163, 0
    %v165 = vlaneseq
    %v166 = vshrl.u32 %v165, 7
    %168 = vset.pattern.permute.xlu0 %v166
    %169 = vperm.xlu0 %168, %v164
    %v170 = vpop.permute.xlu0 %169
    %v171 = vperm.slane %v163, 1
    %v172 = vlaneseq
    %v173 = vshrl.u32 %v172, 7
    %175 = vset.pattern.permute.xlu0 %v173
    %176 = vperm.xlu0 %175, %v171
    %v177 = vpop.permute.xlu0 %176
    %v178 = vadd.f32 %v157, %v170
    %v179 = vadd.f32 %v159, %v177
    %vm180 = vcmask 15360
    %v181 = vsel %vm180, %v178, -inf
    %v182 = vrot.slane %v181, 4
    %v183 = vmax.f32 %v181, %v182
    %v184 = vrot.slane %v183, 2
    %v185 = vmax.f32 %v183, %v184
    %v186 = vrot.slane %v185, 1
    %v187 = vmax.f32 %v185, %v186
    %v188 = vsel %vm180, %v179, -inf
    %v189 = vrot.slane %v188, 4
    %v190 = vmax.f32 %v188, %v189
    %v191 = vrot.slane %v190, 2
    %v192 = vmax.f32 %v190, %v191
    %v193 = vrot.slane %v192, 1
    %v194 = vmax.f32 %v192, %v193
    %v195 = vsub.f32 %v178, %v187
    %v196 = vsub.f32 %v179, %v194
    %v197 = vmul.f32 %v195, 1.442695
    %v198 = vpow.pop %v197
    %v199 = vmul.f32 %v196, 1.442695
    %v200 = vpow.pop %v199
    %v201 = vsel %vm180, %v198, 0.0
    %v202 = vrot.slane %v201, 4
    %v203 = vadd.f32 %v201, %v202
    %v204 = vrot.slane %v203, 2
    %v205 = vadd.f32 %v203, %v204
    %v206 = vrot.slane %v205, 1
    %v207 = vadd.f32 %v205, %v206
    %v208 = vsel %vm180, %v200, 0.0
    %v209 = vrot.slane %v208, 4
    %v210 = vadd.f32 %v208, %v209
    %v211 = vrot.slane %v210, 2
    %v212 = vadd.f32 %v210, %v211
    %v213 = vrot.slane %v212, 1
    %v214 = vadd.f32 %v212, %v213
    %v215 = vrcp.pop %v207
    %v216 = vrcp.pop %v214
    %v217 = vmul.f32 %v198, %v215
    %v218 = vmul.f32 %v200, %v216
    %220 = vset.pattern.permute.xlu0 0
    %221 = vperm.xlu0 %220, %v217
    %v222 = vpop.permute.xlu0 %221
    %225 = vset.pattern.permute.xlu0 0
    %226 = vperm.xlu0 %225, %v218
    %v227 = vpop.permute.xlu0 %226
    %v229 = vmul.f32 %v222, %v63
    %v230 = vmul.f32 %v227, %v64
    %v231 = vsel %vm86, %v229, 0.0
    %v232 = vrot.slane %v231, 4
    %v233 = vadd.f32 %v231, %v232
    %v234 = vrot.slane %v233, 2
    %v235 = vadd.f32 %v233, %v234
    %v236 = vrot.slane %v235, 1
    %v237 = vadd.f32 %v235, %v236
    %v238 = vsel %vm86, %v230, 0.0
    %v239 = vrot.slane %v238, 4
    %v240 = vadd.f32 %v238, %v239
    %v241 = vrot.slane %v240, 2
    %v242 = vadd.f32 %v240, %v241
    %v243 = vrot.slane %v242, 1
    %v244 = vadd.f32 %v242, %v243
    %v245 = vpack.c.bf16 %v237, %v237
    %v246 = vpack.c.bf16 %v244, %v244
    %v247 = vld [vmem:[%s6] sm:$0xf]
    %v248 = vld [vmem:[%s6 + $0x4] sm:$0xf]
    %v249 = vld [vmem:[%s6 + $0x8] sm:$0xf]
    %v250 = vld [vmem:[%s6 + $0xc] sm:$0xf]
    %251 = vset.pattern.permute.xlu0 1
    %252 = vperm.xlu0 %251, %v217
    %v253 = vpop.permute.xlu0 %252
    %255 = vset.pattern.permute.xlu0 1
    %256 = vperm.xlu0 %255, %v218
    %v257 = vpop.permute.xlu0 %256
    %v259 = vmul.f32 %v253, %v63
    %v260 = vmul.f32 %v257, %v64
    %v261 = vsel %vm86, %v259, 0.0
    %v262 = vrot.slane %v261, 4
    %v263 = vadd.f32 %v261, %v262
    %v264 = vrot.slane %v263, 2
    %v265 = vadd.f32 %v263, %v264
    %v266 = vrot.slane %v265, 1
    %v267 = vadd.f32 %v265, %v266
    %v268 = vsel %vm86, %v260, 0.0
    %v269 = vrot.slane %v268, 4
    %v270 = vadd.f32 %v268, %v269
    %v271 = vrot.slane %v270, 2
    %v272 = vadd.f32 %v270, %v271
    %v273 = vrot.slane %v272, 1
    %v274 = vadd.f32 %v272, %v273
    %v275 = vpack.c.bf16 %v267, %v267
    %v276 = vpack.c.bf16 %v274, %v274
    %s277 = scalar_lea.vmem %s6, 16
    %v278 = vld [vmem:[%s277] sm:$0xf]
    %v279 = vld [vmem:[%s277 + $0x4] sm:$0xf]
    %v280 = vld [vmem:[%s277 + $0x8] sm:$0xf]
    %v281 = vld [vmem:[%s277 + $0xc] sm:$0xf]
    %v284 = vunpack.c.l.b16 %v275
    %v285 = vunpack.c.l.b16 %v276
    %vm286 = vcmask 1041409
    %v287 = vsel %vm286, %v285, %v284
    %v288 = vpack.c.b16 %v287, %v287
    %v293 = vunpack.c.l.b16 %v278
    %v294 = vunpack.c.l.b16 %v279
    %v295 = vunpack.c.l.b16 %v280
    %v296 = vunpack.c.l.b16 %v281
    %v297 = vpack.c.b16 %v294, %v293
    %v298 = vpack.c.b16 %v296, %v295
    %v302 = vsel %vm86, %v288, 0
    %304 = vmatpush.bf16.msra.mxu0 0
    %305 = vmatpush.bf16.msra.mxu0 0
    %306 = vmatpush.bf16.msra.mxu0 0
    %307 = vmatpush.bf16.msra.mxu0 0
    %308 = vmatpush.bf16.msra.mxu0 0
    %309 = vmatpush.bf16.msra.mxu0 0
    %310 = vmatpush.bf16.msra.mxu0 %v298
    %311 = vmatpush.bf16.msra.mxu0 %v297
    %312 = vmatmul.bf16.gmra.mxu0 %v302
    %v313 = vpop.f32.mrf.mxu0
    %v314 = vadd.f32 0.0, %v313
    %v315 = vpop.f32.mrf.mxu0
    %316 = vdwg.mxu0
    %v319 = vunpack.c.l.b16 %v245
    %v320 = vunpack.c.l.b16 %v246
    %v321 = vsel %vm286, %v320, %v319
    %v322 = vpack.c.b16 %v321, %v321
    %v327 = vunpack.c.l.b16 %v247
    %v328 = vunpack.c.l.b16 %v248
    %v329 = vunpack.c.l.b16 %v249
    %v330 = vunpack.c.l.b16 %v250
    %v331 = vpack.c.b16 %v328, %v327
    %v332 = vpack.c.b16 %v330, %v329
    %v336 = vsel %vm86, %v322, 0
    %338 = vmatpush.bf16.msra.mxu0 0
    %339 = vmatpush.bf16.msra.mxu0 0
    %340 = vmatpush.bf16.msra.mxu0 0
    %341 = vmatpush.bf16.msra.mxu0 0
    %342 = vmatpush.bf16.msra.mxu0 0
    %343 = vmatpush.bf16.msra.mxu0 0
    %344 = vmatpush.bf16.msra.mxu0 %v332
    %345 = vmatpush.bf16.msra.mxu0 %v331
    %346 = vmatmul.bf16.gmra.mxu0 %v336
    %v347 = vpop.f32.mrf.mxu0
    %v348 = vadd.f32 %v314, %v347
    %v349 = vpop.f32.mrf.mxu0
    %350 = vdwg.mxu0
    %v351 = vld [vmem:[%s7] sm:$0x1]
    %v353 = vperm.slane %v351, 0
    %v355 = vadd.f32 %v348, %v353
    %v356 = vpack.c.bf16 %v355, %v355
    %357 = vst [vmem:[#allocation7] sm:$0x1] %v356
    // Predicated region
    $region42: #{tpu_custom_call.1} parent=1 // pred_check
      _
    $region43: #{tpu_custom_call.1} parent=1 // pred_check_branch
      %359 = sbr.rel (0) target = $region45
    $region44: #{tpu_custom_call.1} parent=1 // pred_region
      %361 = vsyncadd [#allocation4], 0
      %s363 = sshll.u32 [#allocation7], 4
      %s364 = int_to_ptr.vmem [resolvable:$true] %s363
      %s365 = sshll.u32 %s8, 4
      %s366 = int_to_ptr.hbm [resolvable:$true] %s365
      %368 = dma.vmem_to_hbm [thread:$0]  %s364, 16, %s366, [#allocation4]
    $region45: #{tpu_custom_call.1} parent=1 // pred_fallthru
      _
    // Predicated region
    $region46: #{tpu_custom_call.1} parent=1 // pred_check
      _
    $region47: #{tpu_custom_call.1} parent=1 // pred_check_branch
      %370 = sbr.rel (0) target = $region49
    $region48: #{tpu_custom_call.1} parent=1 // pred_region
      %372 = dma.done [#allocation4], 16
    $region49: #{tpu_custom_call.1} parent=1 // pred_fallthru
      _
    %373 = vsyncpa [#allocation3], 1
    %374 = vsyncpa [#allocation6], 1
    %375 = vsyncpa [#allocation4], 1

</llo_original>
